<compile_context>
chip_gen: v5e
topology: v5e:2x2
jax: 0.10.0
libtpu: 0.0.40
codegen_flags: <defaults>
</compile_context>

<pallas_src>
import math
from functools import partial

import jax
import jax.numpy as jnp
from jax import lax
from jax.experimental import pallas as pl
from jax.experimental.pallas import tpu as pltpu


def _mha_kernel(x_ref, w_ref, o_ref, *, B, T, d_out, num_heads, head_dim):
    # Fused QKV projection: one MXU matmul, M = B*T rows, N = 3*d_out lanes.
    x = x_ref[...]                                   # (B*T, d_in)      bf16
    w = w_ref[...]                                   # (d_in, 3*d_out)  bf16 (wq pre-scaled)
    qkv = jnp.dot(x, w, preferred_element_type=jnp.float32)     # (B*T, 3*d_out) f32
    qkv = qkv.reshape(B, T, 3 * d_out)               # leading-dim split only; lane dim untouched

    # Causal mask shared by all batches / heads.
    row = lax.broadcasted_iota(jnp.int32, (T, T), 0)
    col = lax.broadcasted_iota(jnp.int32, (T, T), 1)
    causal = col <= row                              # (T, T) bool
    neg_inf = jnp.float32(-jnp.inf)

    # Static loop over heads; each iteration is batched over B with a single
    # batch-dim dot_general (no .T, no list+concatenate, direct o_ref stores).
    # TODO(synk): a full (B*H)-batched contraction would need an in-kernel (T,H)
    # transpose/relayout; at H=4 the unrolled loop + direct column stores is the
    # robust choice.
    for h in range(num_heads):
        q = qkv[:, :, h * head_dim:(h + 1) * head_dim].astype(jnp.bfloat16)              # (B,T,hd)
        k = qkv[:, :, d_out + h * head_dim:d_out + (h + 1) * head_dim].astype(jnp.bfloat16)
        v = qkv[:, :, 2 * d_out + h * head_dim:2 * d_out + (h + 1) * head_dim].astype(jnp.bfloat16)

        # Scores (B, T, T): MXU bf16 x bf16 -> f32 accumulate; scale already in q (via wq).
        s = jnp.einsum('bqd,bkd->bqk', q, k, preferred_element_type=jnp.float32)
        s = jnp.where(causal, s, neg_inf)

        # Numerically-stable softmax in f32; divide on the EUP (free slot).
        m = jnp.max(s, axis=-1, keepdims=True)
        e = jnp.exp(s - m)
        denom = jnp.sum(e, axis=-1, keepdims=True)
        p = e * pl.reciprocal(denom, approx=True)

        # TODO(synk): nn.Dropout on attn_weights is identity in eval mode; not applied.
        ctx = jnp.einsum('bqk,bkd->bqd', p.astype(jnp.bfloat16), v,
                         preferred_element_type=jnp.float32)                              # (B,T,hd)

        # Direct per-head column store (sub-128-lane masked store is unavoidable at d_out=32).
        o_ref[:, :, h * head_dim:(h + 1) * head_dim] = ctx.astype(o_ref.dtype)


def multihead_attention(x, wq, wk, wv, *, num_heads):
    """x: (B, T, d_in) f32; wq/wk/wv: (d_in, d_out) f32. Returns (B, T, d_out) f32."""
    B, T, d_in = x.shape
    d_out = wq.shape[1]
    assert d_out % num_heads == 0
    head_dim = d_out // num_heads
    scale = 1.0 / math.sqrt(head_dim)

    # Host-side fusion: fold the 1/sqrt(head_dim) scale into wq, fuse Q/K/V weights,
    # cast MXU operands to bf16, and flatten batch*seq into the matmul M dimension.
    wqkv = jnp.concatenate([wq * scale, wk, wv], axis=1).astype(jnp.bfloat16)   # (d_in, 3*d_out)
    x_flat = x.reshape(B * T, d_in).astype(jnp.bfloat16)                        # (B*T, d_in)

    kernel = partial(_mha_kernel, B=B, T=T, d_out=d_out,
                     num_heads=num_heads, head_dim=head_dim)

    return pl.pallas_call(
        kernel,
        out_shape=jax.ShapeDtypeStruct((B, T, d_out), x.dtype),
        grid_spec=pltpu.PrefetchScalarGridSpec(
            num_scalar_prefetch=0,
            grid=(1,),   # whole toy problem in one step: no per-step pipeline overhead
            in_specs=[
                pl.BlockSpec((B * T, d_in), lambda i: (0, 0)),
                pl.BlockSpec((d_in, 3 * d_out), lambda i: (0, 0)),
            ],
            out_specs=pl.BlockSpec((B, T, d_out), lambda i: (0, 0, 0)),
        ),
        compiler_params=pltpu.CompilerParams(
            dimension_semantics=("arbitrary",)),
    )(x_flat, wqkv)


def _reference_f32(x, wq, wk, wv, num_heads):
    """Pure-f32 JAX reference mirroring the PyTorch forward exactly."""
    B, T, d_in = x.shape
    d_out = wq.shape[1]
    hd = d_out // num_heads
    q = (x @ wq).reshape(B, T, num_heads, hd).transpose(0, 2, 1, 3)
    k = (x @ wk).reshape(B, T, num_heads, hd).transpose(0, 2, 1, 3)
    v = (x @ wv).reshape(B, T, num_heads, hd).transpose(0, 2, 1, 3)
    s = jnp.einsum("bhqd,bhkd->bhqk", q, k)
    mask = jnp.triu(jnp.ones((T, T), dtype=bool), k=1)
    s = jnp.where(mask, -jnp.inf, s)
    w = jax.nn.softmax(s / math.sqrt(hd), axis=-1)
    ctx = jnp.einsum("bhqk,bhkd->bhqd", w, v)
    return ctx.transpose(0, 2, 1, 3).reshape(B, T, d_out)


def _reference_mixed(x, wq, wk, wv, num_heads):
    """Reference mirroring the kernel's mixed-precision policy (bf16 MXU operands,
    f32 accumulation & softmax), so it can be compared at tight tolerance."""
    B, T, d_in = x.shape
    d_out = wq.shape[1]
    hd = d_out // num_heads
    scale = 1.0 / math.sqrt(hd)
    bf16 = jnp.bfloat16
    wqkv = jnp.concatenate([wq * scale, wk, wv], axis=1).astype(bf16)
    xf = x.reshape(B * T, d_in).astype(bf16)
    qkv = jnp.dot(xf, wqkv, preferred_element_type=jnp.float32).reshape(B, T, 3 * d_out)
    causal = jnp.tril(jnp.ones((T, T), dtype=bool))
    outs = []
    for h in range(num_heads):
        q = qkv[:, :, h * hd:(h + 1) * hd].astype(bf16)
        k = qkv[:, :, d_out + h * hd:d_out + (h + 1) * hd].astype(bf16)
        v = qkv[:, :, 2 * d_out + h * hd:2 * d_out + (h + 1) * hd].astype(bf16)
        s = jnp.einsum('bqd,bkd->bqk', q, k, preferred_element_type=jnp.float32)
        s = jnp.where(causal, s, -jnp.inf)
        m = jnp.max(s, axis=-1, keepdims=True)
        e = jnp.exp(s - m)
        p = e / jnp.sum(e, axis=-1, keepdims=True)
        outs.append(jnp.einsum('bqk,bkd->bqd', p.astype(bf16), v,
                               preferred_element_type=jnp.float32))
    return jnp.concatenate(outs, axis=-1)


if __name__ == "__main__":
    # Small deterministic config consistent with the module:
    #   d_in=32, d_out=32, context_length=8 (=seq), num_heads=4, qkv_bias=False
    B, T, d_in, d_out, num_heads = 2, 8, 32, 32, 4

    key = jax.random.PRNGKey(0)
    kx, kq, kk, kv = jax.random.split(key, 4)
    x = jax.random.normal(kx, (B, T, d_in), dtype=jnp.float32)
    # Deterministic parameter init (Linear weights, stored as (d_in, d_out)).
    wq = jax.random.normal(kq, (d_in, d_out), dtype=jnp.float32) * (1.0 / math.sqrt(d_in))
    wk = jax.random.normal(kk, (d_in, d_out), dtype=jnp.float32) * (1.0 / math.sqrt(d_in))
    wv = jax.random.normal(kv, (d_in, d_out), dtype=jnp.float32) * (1.0 / math.sqrt(d_in))

    out = multihead_attention(x, wq, wk, wv, num_heads=num_heads)
    out = jax.block_until_ready(out)
    assert out.shape == (B, T, d_out)

    # Tight check vs. a reference using the same mixed-precision policy
    # (differences: MXU accumulation order + approx EUP reciprocal).
    ref_mixed = _reference_mixed(x, wq, wk, wv, num_heads)
    assert jnp.allclose(out, ref_mixed, atol=2e-2, rtol=2e-2), "mismatch vs mixed-precision reference"

    # Sanity check vs. the exact f32 PyTorch math (bf16 MXU inputs => ~1e-2 agreement).
    ref_f32 = _reference_f32(x, wq, wk, wv, num_heads)
    assert jnp.allclose(out, ref_f32, atol=1e-1, rtol=1e-1), "mismatch vs f32 reference"

    print("KERNEL_OK")
</pallas_src>

<mosaic_0001>
module attributes {stable_mosaic.version = 11 : i64} {
  func.func @_mha_kernel(%arg0: i32, %arg1: memref<16x32xbf16, #tpu.memory_space<vmem>>, %arg2: memref<32x96xbf16, #tpu.memory_space<vmem>>, %arg3: memref<2x8x32xf32, #tpu.memory_space<vmem>>) attributes {dimension_semantics = [#tpu.dimension_semantics<arbitrary>], iteration_bounds = array<i64: 1>, scalar_prefetch = 0 : i64, scratch_operands = 0 : i64, tpu.core_type = #tpu.core_type<tc>, window_params = [{pipeline_mode = #tpu.pipeline_mode<synchronous>, transform_indices = @transform_0, window_bounds = array<i64: 16, 32>}, {pipeline_mode = #tpu.pipeline_mode<synchronous>, transform_indices = @transform_1, window_bounds = array<i64: 32, 96>}, {pipeline_mode = #tpu.pipeline_mode<synchronous>, transform_indices = @transform_2, window_bounds = array<i64: 2, 8, 32>}]} {
    %c0 = arith.constant 0 : index
    %c0_0 = arith.constant 0 : index
    %0 = vector.load %arg1[%c0, %c0_0] : memref<16x32xbf16, #tpu.memory_space<vmem>>, vector<16x32xbf16>
    %c0_1 = arith.constant 0 : index
    %c0_2 = arith.constant 0 : index
    %1 = vector.load %arg2[%c0_1, %c0_2] : memref<32x96xbf16, #tpu.memory_space<vmem>>, vector<32x96xbf16>
    %cst = arith.constant dense<0.000000e+00> : vector<16x96xf32>
    %2 = tpu.matmul %0, %1, %cst {dimension_numbers = #tpu.dot_dimension_numbers<[1], [0], [0], [1], [0, 0, 1, 1], [], []>} : vector<16x32xbf16>, vector<32x96xbf16>, vector<16x96xf32> -> vector<16x96xf32>
    %3 = vector.shape_cast %2 : vector<16x96xf32> to vector<2x8x96xf32>
    %4 = tpu.iota {dimensions = array<i32: 0>} : vector<8x8xi32>
    %5 = tpu.iota {dimensions = array<i32: 1>} : vector<8x8xi32>
    %6 = arith.cmpi sle, %5, %4 : vector<8x8xi32>
    %7 = vector.extract_strided_slice %3 {offsets = [0, 0, 0], sizes = [2, 8, 8], strides = [1, 1, 1]} : vector<2x8x96xf32> to vector<2x8x8xf32>
    %8 = arith.truncf %7 : vector<2x8x8xf32> to vector<2x8x8xbf16>
    %9 = vector.extract_strided_slice %3 {offsets = [0, 0, 32], sizes = [2, 8, 8], strides = [1, 1, 1]} : vector<2x8x96xf32> to vector<2x8x8xf32>
    %10 = arith.truncf %9 : vector<2x8x8xf32> to vector<2x8x8xbf16>
    %11 = vector.extract_strided_slice %3 {offsets = [0, 0, 64], sizes = [2, 8, 8], strides = [1, 1, 1]} : vector<2x8x96xf32> to vector<2x8x8xf32>
    %12 = arith.truncf %11 : vector<2x8x8xf32> to vector<2x8x8xbf16>
    "tpu.trace_start"() <{level = 10 : i32, message = "bqd,bkd->bqk"}> : () -> ()
    %cst_3 = arith.constant dense<0.000000e+00> : vector<2x8x8xf32>
    %13 = tpu.matmul %8, %10, %cst_3 {dimension_numbers = #tpu.dot_dimension_numbers<[2], [2], [1], [1], [0, 0, 0, 1, 1, 1], [0], [0]>} : vector<2x8x8xbf16>, vector<2x8x8xbf16>, vector<2x8x8xf32> -> vector<2x8x8xf32>
    %cst_4 = arith.constant 0xFF800000 : f32
    "tpu.trace_stop"() : () -> ()
    %14 = vector.shape_cast %6 : vector<8x8xi1> to vector<1x8x8xi1>
    %15 = vector.broadcast %14 : vector<1x8x8xi1> to vector<2x8x8xi1>
    %16 = vector.broadcast %cst_4 : f32 to vector<2x8x8xf32>
    %17 = arith.select %15, %13, %16 : vector<2x8x8xi1>, vector<2x8x8xf32>
    %cst_5 = arith.constant dense<0xFF800000> : vector<2x8xf32>
    %18 = vector.multi_reduction <maximumf>, %17, %cst_5 [2] : vector<2x8x8xf32> to vector<2x8xf32>
    %19 = vector.shape_cast %18 : vector<2x8xf32> to vector<2x8x1xf32>
    %20 = vector.broadcast %19 : vector<2x8x1xf32> to vector<2x8x8xf32>
    %21 = arith.subf %17, %20 : vector<2x8x8xf32>
    %22 = math.exp %21 : vector<2x8x8xf32>
    %cst_6 = arith.constant dense<0.000000e+00> : vector<2x8xf32>
    %23 = vector.multi_reduction <add>, %22, %cst_6 [2] : vector<2x8x8xf32> to vector<2x8xf32>
    %24 = vector.shape_cast %23 : vector<2x8xf32> to vector<2x8x1xf32>
    %25 = tpu.reciprocal %24 {approx = true} : vector<2x8x1xf32> -> vector<2x8x1xf32>
    %26 = vector.broadcast %25 : vector<2x8x1xf32> to vector<2x8x8xf32>
    %27 = arith.mulf %22, %26 : vector<2x8x8xf32>
    %28 = arith.truncf %27 : vector<2x8x8xf32> to vector<2x8x8xbf16>
    "tpu.trace_start"() <{level = 10 : i32, message = "bqk,bkd->bqd"}> : () -> ()
    %cst_7 = arith.constant dense<0.000000e+00> : vector<2x8x8xf32>
    %29 = tpu.matmul %28, %12, %cst_7 {dimension_numbers = #tpu.dot_dimension_numbers<[2], [1], [1], [2], [0, 0, 0, 1, 1, 2], [0], [0]>} : vector<2x8x8xbf16>, vector<2x8x8xbf16>, vector<2x8x8xf32> -> vector<2x8x8xf32>
    "tpu.trace_stop"() : () -> ()
    %c0_8 = arith.constant 0 : index
    %c0_9 = arith.constant 0 : index
    %c0_10 = arith.constant 0 : index
    %30 = vector.load %arg3[%c0_8, %c0_9, %c0_10] : memref<2x8x32xf32, #tpu.memory_space<vmem>>, vector<2x8x8xf32>
    tpu.vector_store %arg3[%c0_8, %c0_9, %c0_10], %29 {strides = array<i32>} : memref<2x8x32xf32, #tpu.memory_space<vmem>>, vector<2x8x8xf32>,
    %31 = vector.extract_strided_slice %3 {offsets = [0, 0, 8], sizes = [2, 8, 8], strides = [1, 1, 1]} : vector<2x8x96xf32> to vector<2x8x8xf32>
    %32 = arith.truncf %31 : vector<2x8x8xf32> to vector<2x8x8xbf16>
    %33 = vector.extract_strided_slice %3 {offsets = [0, 0, 40], sizes = [2, 8, 8], strides = [1, 1, 1]} : vector<2x8x96xf32> to vector<2x8x8xf32>
    %34 = arith.truncf %33 : vector<2x8x8xf32> to vector<2x8x8xbf16>
    %35 = vector.extract_strided_slice %3 {offsets = [0, 0, 72], sizes = [2, 8, 8], strides = [1, 1, 1]} : vector<2x8x96xf32> to vector<2x8x8xf32>
    %36 = arith.truncf %35 : vector<2x8x8xf32> to vector<2x8x8xbf16>
    "tpu.trace_start"() <{level = 10 : i32, message = "bqd,bkd->bqk"}> : () -> ()
    %cst_11 = arith.constant dense<0.000000e+00> : vector<2x8x8xf32>
    %37 = tpu.matmul %32, %34, %cst_11 {dimension_numbers = #tpu.dot_dimension_numbers<[2], [2], [1], [1], [0, 0, 0, 1, 1, 1], [0], [0]>} : vector<2x8x8xbf16>, vector<2x8x8xbf16>, vector<2x8x8xf32> -> vector<2x8x8xf32>
    %cst_12 = arith.constant 0xFF800000 : f32
    "tpu.trace_stop"() : () -> ()
    %38 = vector.shape_cast %6 : vector<8x8xi1> to vector<1x8x8xi1>
    %39 = vector.broadcast %38 : vector<1x8x8xi1> to vector<2x8x8xi1>
    %40 = vector.broadcast %cst_12 : f32 to vector<2x8x8xf32>
    %41 = arith.select %39, %37, %40 : vector<2x8x8xi1>, vector<2x8x8xf32>
    %cst_13 = arith.constant dense<0xFF800000> : vector<2x8xf32>
    %42 = vector.multi_reduction <maximumf>, %41, %cst_13 [2] : vector<2x8x8xf32> to vector<2x8xf32>
    %43 = vector.shape_cast %42 : vector<2x8xf32> to vector<2x8x1xf32>
    %44 = vector.broadcast %43 : vector<2x8x1xf32> to vector<2x8x8xf32>
    %45 = arith.subf %41, %44 : vector<2x8x8xf32>
    %46 = math.exp %45 : vector<2x8x8xf32>
    %cst_14 = arith.constant dense<0.000000e+00> : vector<2x8xf32>
    %47 = vector.multi_reduction <add>, %46, %cst_14 [2] : vector<2x8x8xf32> to vector<2x8xf32>
    %48 = vector.shape_cast %47 : vector<2x8xf32> to vector<2x8x1xf32>
    %49 = tpu.reciprocal %48 {approx = true} : vector<2x8x1xf32> -> vector<2x8x1xf32>
    %50 = vector.broadcast %49 : vector<2x8x1xf32> to vector<2x8x8xf32>
    %51 = arith.mulf %46, %50 : vector<2x8x8xf32>
    %52 = arith.truncf %51 : vector<2x8x8xf32> to vector<2x8x8xbf16>
    "tpu.trace_start"() <{level = 10 : i32, message = "bqk,bkd->bqd"}> : () -> ()
    %cst_15 = arith.constant dense<0.000000e+00> : vector<2x8x8xf32>
    %53 = tpu.matmul %52, %36, %cst_15 {dimension_numbers = #tpu.dot_dimension_numbers<[2], [1], [1], [2], [0, 0, 0, 1, 1, 2], [0], [0]>} : vector<2x8x8xbf16>, vector<2x8x8xbf16>, vector<2x8x8xf32> -> vector<2x8x8xf32>
    "tpu.trace_stop"() : () -> ()
    %c0_16 = arith.constant 0 : index
    %c0_17 = arith.constant 0 : index
    %c8 = arith.constant 8 : index
    %54 = vector.load %arg3[%c0_16, %c0_17, %c8] : memref<2x8x32xf32, #tpu.memory_space<vmem>>, vector<2x8x8xf32>
    tpu.vector_store %arg3[%c0_16, %c0_17, %c8], %53 {strides = array<i32>} : memref<2x8x32xf32, #tpu.memory_space<vmem>>, vector<2x8x8xf32>,
    %55 = vector.extract_strided_slice %3 {offsets = [0, 0, 16], sizes = [2, 8, 8], strides = [1, 1, 1]} : vector<2x8x96xf32> to vector<2x8x8xf32>
    %56 = arith.truncf %55 : vector<2x8x8xf32> to vector<2x8x8xbf16>
    %57 = vector.extract_strided_slice %3 {offsets = [0, 0, 48], sizes = [2, 8, 8], strides = [1, 1, 1]} : vector<2x8x96xf32> to vector<2x8x8xf32>
    %58 = arith.truncf %57 : vector<2x8x8xf32> to vector<2x8x8xbf16>
    %59 = vector.extract_strided_slice %3 {offsets = [0, 0, 80], sizes = [2, 8, 8], strides = [1, 1, 1]} : vector<2x8x96xf32> to vector<2x8x8xf32>
    %60 = arith.truncf %59 : vector<2x8x8xf32> to vector<2x8x8xbf16>
    "tpu.trace_start"() <{level = 10 : i32, message = "bqd,bkd->bqk"}> : () -> ()
    %cst_18 = arith.constant dense<0.000000e+00> : vector<2x8x8xf32>
    %61 = tpu.matmul %56, %58, %cst_18 {dimension_numbers = #tpu.dot_dimension_numbers<[2], [2], [1], [1], [0, 0, 0, 1, 1, 1], [0], [0]>} : vector<2x8x8xbf16>, vector<2x8x8xbf16>, vector<2x8x8xf32> -> vector<2x8x8xf32>
    %cst_19 = arith.constant 0xFF800000 : f32
    "tpu.trace_stop"() : () -> ()
    %62 = vector.shape_cast %6 : vector<8x8xi1> to vector<1x8x8xi1>
    %63 = vector.broadcast %62 : vector<1x8x8xi1> to vector<2x8x8xi1>
    %64 = vector.broadcast %cst_19 : f32 to vector<2x8x8xf32>
    %65 = arith.select %63, %61, %64 : vector<2x8x8xi1>, vector<2x8x8xf32>
    %cst_20 = arith.constant dense<0xFF800000> : vector<2x8xf32>
    %66 = vector.multi_reduction <maximumf>, %65, %cst_20 [2] : vector<2x8x8xf32> to vector<2x8xf32>
    %67 = vector.shape_cast %66 : vector<2x8xf32> to vector<2x8x1xf32>
    %68 = vector.broadcast %67 : vector<2x8x1xf32> to vector<2x8x8xf32>
    %69 = arith.subf %65, %68 : vector<2x8x8xf32>
    %70 = math.exp %69 : vector<2x8x8xf32>
    %cst_21 = arith.constant dense<0.000000e+00> : vector<2x8xf32>
    %71 = vector.multi_reduction <add>, %70, %cst_21 [2] : vector<2x8x8xf32> to vector<2x8xf32>
    %72 = vector.shape_cast %71 : vector<2x8xf32> to vector<2x8x1xf32>
    %73 = tpu.reciprocal %72 {approx = true} : vector<2x8x1xf32> -> vector<2x8x1xf32>
    %74 = vector.broadcast %73 : vector<2x8x1xf32> to vector<2x8x8xf32>
    %75 = arith.mulf %70, %74 : vector<2x8x8xf32>
    %76 = arith.truncf %75 : vector<2x8x8xf32> to vector<2x8x8xbf16>
    "tpu.trace_start"() <{level = 10 : i32, message = "bqk,bkd->bqd"}> : () -> ()
    %cst_22 = arith.constant dense<0.000000e+00> : vector<2x8x8xf32>
    %77 = tpu.matmul %76, %60, %cst_22 {dimension_numbers = #tpu.dot_dimension_numbers<[2], [1], [1], [2], [0, 0, 0, 1, 1, 2], [0], [0]>} : vector<2x8x8xbf16>, vector<2x8x8xbf16>, vector<2x8x8xf32> -> vector<2x8x8xf32>
    "tpu.trace_stop"() : () -> ()
    %c0_23 = arith.constant 0 : index
    %c0_24 = arith.constant 0 : index
    %c16 = arith.constant 16 : index
    %78 = vector.load %arg3[%c0_23, %c0_24, %c16] : memref<2x8x32xf32, #tpu.memory_space<vmem>>, vector<2x8x8xf32>
    tpu.vector_store %arg3[%c0_23, %c0_24, %c16], %77 {strides = array<i32>} : memref<2x8x32xf32, #tpu.memory_space<vmem>>, vector<2x8x8xf32>,
    %79 = vector.extract_strided_slice %3 {offsets = [0, 0, 24], sizes = [2, 8, 8], strides = [1, 1, 1]} : vector<2x8x96xf32> to vector<2x8x8xf32>
    %80 = arith.truncf %79 : vector<2x8x8xf32> to vector<2x8x8xbf16>
    %81 = vector.extract_strided_slice %3 {offsets = [0, 0, 56], sizes = [2, 8, 8], strides = [1, 1, 1]} : vector<2x8x96xf32> to vector<2x8x8xf32>
    %82 = arith.truncf %81 : vector<2x8x8xf32> to vector<2x8x8xbf16>
    %83 = vector.extract_strided_slice %3 {offsets = [0, 0, 88], sizes = [2, 8, 8], strides = [1, 1, 1]} : vector<2x8x96xf32> to vector<2x8x8xf32>
    %84 = arith.truncf %83 : vector<2x8x8xf32> to vector<2x8x8xbf16>
    "tpu.trace_start"() <{level = 10 : i32, message = "bqd,bkd->bqk"}> : () -> ()
    %cst_25 = arith.constant dense<0.000000e+00> : vector<2x8x8xf32>
    %85 = tpu.matmul %80, %82, %cst_25 {dimension_numbers = #tpu.dot_dimension_numbers<[2], [2], [1], [1], [0, 0, 0, 1, 1, 1], [0], [0]>} : vector<2x8x8xbf16>, vector<2x8x8xbf16>, vector<2x8x8xf32> -> vector<2x8x8xf32>
    %cst_26 = arith.constant 0xFF800000 : f32
    "tpu.trace_stop"() : () -> ()
    %86 = vector.shape_cast %6 : vector<8x8xi1> to vector<1x8x8xi1>
    %87 = vector.broadcast %86 : vector<1x8x8xi1> to vector<2x8x8xi1>
    %88 = vector.broadcast %cst_26 : f32 to vector<2x8x8xf32>
    %89 = arith.select %87, %85, %88 : vector<2x8x8xi1>, vector<2x8x8xf32>
    %cst_27 = arith.constant dense<0xFF800000> : vector<2x8xf32>
    %90 = vector.multi_reduction <maximumf>, %89, %cst_27 [2] : vector<2x8x8xf32> to vector<2x8xf32>
    %91 = vector.shape_cast %90 : vector<2x8xf32> to vector<2x8x1xf32>
    %92 = vector.broadcast %91 : vector<2x8x1xf32> to vector<2x8x8xf32>
    %93 = arith.subf %89, %92 : vector<2x8x8xf32>
    %94 = math.exp %93 : vector<2x8x8xf32>
    %cst_28 = arith.constant dense<0.000000e+00> : vector<2x8xf32>
    %95 = vector.multi_reduction <add>, %94, %cst_28 [2] : vector<2x8x8xf32> to vector<2x8xf32>
    %96 = vector.shape_cast %95 : vector<2x8xf32> to vector<2x8x1xf32>
    %97 = tpu.reciprocal %96 {approx = true} : vector<2x8x1xf32> -> vector<2x8x1xf32>
    %98 = vector.broadcast %97 : vector<2x8x1xf32> to vector<2x8x8xf32>
    %99 = arith.mulf %94, %98 : vector<2x8x8xf32>
    %100 = arith.truncf %99 : vector<2x8x8xf32> to vector<2x8x8xbf16>
    "tpu.trace_start"() <{level = 10 : i32, message = "bqk,bkd->bqd"}> : () -> ()
    %cst_29 = arith.constant dense<0.000000e+00> : vector<2x8x8xf32>
    %101 = tpu.matmul %100, %84, %cst_29 {dimension_numbers = #tpu.dot_dimension_numbers<[2], [1], [1], [2], [0, 0, 0, 1, 1, 2], [0], [0]>} : vector<2x8x8xbf16>, vector<2x8x8xbf16>, vector<2x8x8xf32> -> vector<2x8x8xf32>
    "tpu.trace_stop"() : () -> ()
    %c0_30 = arith.constant 0 : index
    %c0_31 = arith.constant 0 : index
    %c24 = arith.constant 24 : index
    %102 = vector.load %arg3[%c0_30, %c0_31, %c24] : memref<2x8x32xf32, #tpu.memory_space<vmem>>, vector<2x8x8xf32>
    tpu.vector_store %arg3[%c0_30, %c0_31, %c24], %101 {strides = array<i32>} : memref<2x8x32xf32, #tpu.memory_space<vmem>>, vector<2x8x8xf32>,
    return
  }
  func.func @transform_0(%arg0: i32) -> (i32, i32) {
    %c0_i32 = arith.constant 0 : i32
    %c0_i32_0 = arith.constant 0 : i32
    %c0_i32_1 = arith.constant 0 : i32
    return %c0_i32, %c0_i32_0 : i32, i32
  }
  func.func @transform_1(%arg0: i32) -> (i32, i32) {
    %c0_i32 = arith.constant 0 : i32
    %c0_i32_0 = arith.constant 0 : i32
    %c0_i32_1 = arith.constant 0 : i32
    return %c0_i32, %c0_i32_0 : i32, i32
  }
  func.func @transform_2(%arg0: i32) -> (i32, i32, i32) {
    %c0_i32 = arith.constant 0 : i32
    %c0_i32_0 = arith.constant 0 : i32
    %c0_i32_1 = arith.constant 0 : i32
    %c0_i32_2 = arith.constant 0 : i32
    return %c0_i32, %c0_i32_0, %c0_i32_1 : i32, i32, i32
  }
}

</mosaic_0001>

<llo_original>
// kernel: tpu_custom_call.1
$region0: #{tpu_custom_call.1}
  #allocation0 [shape = 'u32[]', space=smem, size = 0x4, offset = 0x4, fixed_abs, tag = 'smem constant byte address 0x4 - core index']
  #allocation1 [shape = 'u32[72,128]{1,0:T(1,128)}', space=vmem, size = 0x9000, scoped, tag = 'internal scratch']
  %s0 = inlined_call_operand.hbm [shape: bf16[16,32], index: 0, kind: input, shape index: {}]
  %s1 = inlined_call_operand.hbm [shape: bf16[32,96], index: 1, kind: input, shape index: {}]
  %s2 = inlined_call_operand.hbm [shape: f32[2,8,32], index: 2, kind: output, shape index: {}]
  %s3 = sld [smem:[#allocation0]]
  $region26: #{tpu_custom_call.1} parent=0
    _
  %s5 = ssub.s32 1, %s3
  %s6 = scalar_select 0, %s5, %s3
  $region1: #{tpu_custom_call.1} parent=0
    #allocation2 [shape = 'u8[4096]{0}', space=vmem, size = 0x1000, scoped, tag = 'input window, operand 0, single buffered']
    #allocation3 [shape = 's32[1]{0}', space=sflag, size = 0x4, scoped, tag = 'scoped memory for tpu_custom_call.1']
    #allocation4 [shape = 's32[1]{0}', space=sflag, size = 0x4, scoped, tag = 'scoped memory for tpu_custom_call.1']
    #allocation5 [shape = 'u8[8192]{0}', space=vmem, size = 0x2000, scoped, tag = 'input window, operand 1, single buffered']
    #allocation6 [shape = 's32[1]{0}', space=sflag, size = 0x4, scoped, tag = 'scoped memory for tpu_custom_call.1']
    #allocation7 [shape = 'u8[8192]{0}', space=vmem, size = 0x2000, scoped, tag = 'output window, operand 0, single buffered']
    %7 = vsyncpa [#allocation3], 0
    %8 = vsyncpa [#allocation6], 0
    %9 = vsyncpa [#allocation4], 0
    // Predicated region
    $region2: #{tpu_custom_call.1} parent=1 // pred_check
      _
    $region3: #{tpu_custom_call.1} parent=1 // pred_check_branch
      %11 = sbr.rel (0) target = $region5
    $region4: #{tpu_custom_call.1} parent=1 // pred_region
      %13 = vsyncadd [#allocation3], 0
      %s14 = sshll.u32 %s0, 4
      %s15 = int_to_ptr.hbm [resolvable:$true] %s14
      %s16 = sshll.u32 [#allocation2], 4
      %s17 = int_to_ptr.vmem [resolvable:$true] %s16
      %22 = dma.hbm_to_vmem [thread:$0]  %s15, 128, %s17, [#allocation3], 64, 64, 4
    $region5: #{tpu_custom_call.1} parent=1 // pred_fallthru
      _
    // Predicated region
    $region6: #{tpu_custom_call.1} parent=1 // pred_check
      _
    $region7: #{tpu_custom_call.1} parent=1 // pred_check_branch
      %24 = sbr.rel (0) target = $region9
    $region8: #{tpu_custom_call.1} parent=1 // pred_region
      %26 = vsyncadd [#allocation6], 0
      %s27 = sshll.u32 %s1, 4
      %s28 = int_to_ptr.hbm [resolvable:$true] %s27
      %s29 = sshll.u32 [#allocation5], 4
      %s30 = int_to_ptr.vmem [resolvable:$true] %s29
      %35 = dma.hbm_to_vmem [thread:$0]  %s28, 256, %s30, [#allocation6], 64, 64, 4
    $region9: #{tpu_custom_call.1} parent=1 // pred_fallthru
      _
    // Predicated region
    $region10: #{tpu_custom_call.1} parent=1 // pred_check
      _
    $region11: #{tpu_custom_call.1} parent=1 // pred_check_branch
      %37 = sbr.rel (0) target = $region13
    $region12: #{tpu_custom_call.1} parent=1 // pred_region
      %39 = dma.done [#allocation3], 128
    $region13: #{tpu_custom_call.1} parent=1 // pred_fallthru
      _
    // Predicated region
    $region14: #{tpu_custom_call.1} parent=1 // pred_check
      _
    $region15: #{tpu_custom_call.1} parent=1 // pred_check_branch
      %41 = sbr.rel (0) target = $region17
    $region16: #{tpu_custom_call.1} parent=1 // pred_region
      %43 = dma.done [#allocation6], 256
    $region17: #{tpu_custom_call.1} parent=1 // pred_fallthru
      _
    %v45 = vld [vmem:[#allocation2] sm:$0xf]
    %v46 = vld [vmem:[#allocation2 + $0x4] sm:$0xf]
    %v47 = vld [vmem:[#allocation5] sm:$0xf]
    %v48 = vld [vmem:[#allocation5 + $0x4] sm:$0xf]
    %v49 = vld [vmem:[#allocation5 + $0x8] sm:$0xf]
    %v50 = vld [vmem:[#allocation5 + $0xc] sm:$0xf]
    %v53 = vunpack.c.l.b16 %v45
    %v54 = vunpack.c.l.b16 %v46
    %v55 = vpack.c.b16 %v54, %v53
    %v60 = vunpack.c.l.b16 %v47
    %v61 = vunpack.c.l.b16 %v48
    %v62 = vunpack.c.l.b16 %v49
    %v63 = vunpack.c.l.b16 %v50
    %v64 = vpack.c.b16 %v61, %v60
    %v65 = vpack.c.b16 %v63, %v62
    %vm68 = vcmask 261120
    %v70 = vsel %vm68, %v55, 0
    %72 = vmatpush.bf16.msra.mxu0 0
    %73 = vmatpush.bf16.msra.mxu0 0
    %74 = vmatpush.bf16.msra.mxu0 0
    %75 = vmatpush.bf16.msra.mxu0 0
    %76 = vmatpush.bf16.msra.mxu0 0
    %77 = vmatpush.bf16.msra.mxu0 0
    %78 = vmatpush.bf16.msra.mxu0 %v65
    %79 = vmatpush.bf16.msra.mxu0 %v64
    %80 = vmatmul.bf16.gmra.mxu0 %v70
    %v81 = vpop.f32.mrf.mxu0
    %v82 = vadd.f32 0.0, %v81
    %v83 = vpop.f32.mrf.mxu0
    %v84 = vadd.f32 0.0, %v83
    %85 = vdwg.mxu0
    %v86 = vlaneseq
    %v87 = vshrl.u32 %v86, 7
    %v88 = vlaneseq
    %v89 = vand.u32 %v88, 127
    %vm90 = vcmp.le.s32.totalorder %v89, %v87
    %v91 = vpack.c.bf16 %v82, %v82
    %v92 = vpack.c.bf16 %v84, %v84
    %v94 = vunpack.c.l.b16 %v91
    %v95 = vpack.c.b16 %v94, %v94
    %96 = vrot.lane.b32.xlu0 %v95, 96
    %v97 = vpop.permute.xlu0 %96
    %vm98 = vcmask 64512
    %v100 = vsel %vm98, %v91, 0
    %v103 = vsel %vm98, %v97, 0
    %105 = vmatpush.bf16.xpose.msra.mxu0 0
    %106 = vmatpush.bf16.xpose.msra.mxu0 0
    %107 = vmatpush.bf16.xpose.msra.mxu0 0
    %108 = vmatpush.bf16.xpose.msra.mxu0 0
    %109 = vmatpush.bf16.xpose.msra.mxu0 0
    %110 = vmatpush.bf16.xpose.msra.mxu0 0
    %111 = vmatpush.bf16.xpose.msra.mxu0 0
    %112 = vmatpush.bf16.xpose.msra.mxu0 %v103
    %113 = vmatmul.bf16.gmra.mxu0 %v100
    %v114 = vpop.f32.mrf.mxu0
    %v115 = vadd.f32 0.0, %v114
    %v116 = vpop.f32.mrf.mxu0
    %117 = vdwg.mxu0
    %v119 = vunpack.c.l.b16 %v92
    %v120 = vpack.c.b16 %v119, %v119
    %121 = vrot.lane.b32.xlu0 %v120, 96
    %v122 = vpop.permute.xlu0 %121
    %v124 = vsel %vm98, %v92, 0
    %v127 = vsel %vm98, %v122, 0
    %129 = vmatpush.bf16.xpose.msra.mxu0 0
    %130 = vmatpush.bf16.xpose.msra.mxu0 0
    %131 = vmatpush.bf16.xpose.msra.mxu0 0
    %132 = vmatpush.bf16.xpose.msra.mxu0 0
    %133 = vmatpush.bf16.xpose.msra.mxu0 0
    %134 = vmatpush.bf16.xpose.msra.mxu0 0
    %135 = vmatpush.bf16.xpose.msra.mxu0 0
    %136 = vmatpush.bf16.xpose.msra.mxu0 %v127
    %137 = vmatmul.bf16.gmra.mxu0 %v124
    %v138 = vpop.f32.mrf.mxu0
    %v139 = vadd.f32 0.0, %v138
    %v140 = vpop.f32.mrf.mxu0
    %141 = vdwg.mxu0
    %v142 = vsel %vm90, 1, 0
    %vm143 = vcmp.eq.s32.totalorder %v142, 1
    %v144 = vsel %vm143, %v115, -inf
    %v145 = vsel %vm143, %v139, -inf
    %v146 = vsel %vm98, %v144, -inf
    %147 = vmax.xlane.f32.xlu0 %v146
    %v148 = vpop.xlane.xlu0 %147
    %v149 = vsel %vm98, %v145, -inf
    %150 = vmax.xlane.f32.xlu0 %v149
    %v151 = vpop.xlane.xlu0 %150
    %v152 = vsub.f32 %v144, %v148
    %v153 = vsub.f32 %v145, %v151
    %v154 = vmul.f32 %v152, 1.442695
    %v155 = vpow.pop %v154
    %v156 = vmul.f32 %v153, 1.442695
    %v157 = vpow.pop %v156
    %v158 = vsel %vm98, %v155, 0.0
    %159 = vadd.xlane.f32.xlu0 %v158
    %v160 = vpop.xlane.xlu0 %159
    %v161 = vsel %vm98, %v157, 0.0
    %162 = vadd.xlane.f32.xlu0 %v161
    %v163 = vpop.xlane.xlu0 %162
    %v164 = vrcp.pop %v160
    %v165 = vrcp.pop %v163
    %v166 = vmul.f32 %v155, %v164
    %v167 = vmul.f32 %v157, %v165
    %v168 = vpack.c.bf16 %v166, %v166
    %v169 = vpack.c.bf16 %v167, %v167
    %170 = vrot.lane.b32.xlu0 %v95, 64
    %v171 = vpop.permute.xlu0 %170
    %v173 = vsel %vm98, %v168, 0
    %vm175 = vcmask 1043456
    %v177 = vsel %vm175, %v171, 0
    %179 = vmatpush.bf16.msra.mxu0 0
    %180 = vmatpush.bf16.msra.mxu0 0
    %181 = vmatpush.bf16.msra.mxu0 0
    %182 = vmatpush.bf16.msra.mxu0 0
    %183 = vmatpush.bf16.msra.mxu0 0
    %184 = vmatpush.bf16.msra.mxu0 0
    %185 = vmatpush.bf16.msra.mxu0 0
    %186 = vmatpush.bf16.msra.mxu0 %v177
    %187 = vmatmul.bf16.gmra.mxu0 %v173
    %v188 = vpop.f32.mrf.mxu0
    %v189 = vadd.f32 0.0, %v188
    %v190 = vpop.f32.mrf.mxu0
    %191 = vdwg.mxu0
    %192 = vrot.lane.b32.xlu0 %v120, 64
    %v193 = vpop.permute.xlu0 %192
    %v195 = vsel %vm98, %v169, 0
    %v198 = vsel %vm175, %v193, 0
    %200 = vmatpush.bf16.msra.mxu0 0
    %201 = vmatpush.bf16.msra.mxu0 0
    %202 = vmatpush.bf16.msra.mxu0 0
    %203 = vmatpush.bf16.msra.mxu0 0
    %204 = vmatpush.bf16.msra.mxu0 0
    %205 = vmatpush.bf16.msra.mxu0 0
    %206 = vmatpush.bf16.msra.mxu0 0
    %207 = vmatpush.bf16.msra.mxu0 %v198
    %208 = vmatmul.bf16.gmra.mxu0 %v195
    %v209 = vpop.f32.mrf.mxu0
    %v210 = vadd.f32 0.0, %v209
    %v211 = vpop.f32.mrf.mxu0
    %212 = vdwg.mxu0
    %213 = vst.msk [vmem:[#allocation7] sm:$0xff] %vm98, %v189
    %214 = vst.msk [vmem:[#allocation7 + $0x8] sm:$0xff] %vm98, %v210
    %215 = vrot.lane.b32.xlu0 %v95, 120
    %v216 = vpop.permute.xlu0 %215
    %217 = vrot.lane.b32.xlu0 %v95, 88
    %v218 = vpop.permute.xlu0 %217
    %v220 = vsel %vm98, %v216, 0
    %v223 = vsel %vm98, %v218, 0
    %225 = vmatpush.bf16.xpose.msra.mxu0 0
    %226 = vmatpush.bf16.xpose.msra.mxu0 0
    %227 = vmatpush.bf16.xpose.msra.mxu0 0
    %228 = vmatpush.bf16.xpose.msra.mxu0 0
    %229 = vmatpush.bf16.xpose.msra.mxu0 0
    %230 = vmatpush.bf16.xpose.msra.mxu0 0
    %231 = vmatpush.bf16.xpose.msra.mxu0 0
    %232 = vmatpush.bf16.xpose.msra.mxu0 %v223
    %233 = vmatmul.bf16.gmra.mxu0 %v220
    %v234 = vpop.f32.mrf.mxu0
    %v235 = vadd.f32 0.0, %v234
    %v236 = vpop.f32.mrf.mxu0
    %237 = vdwg.mxu0
    %238 = vrot.lane.b32.xlu0 %v120, 120
    %v239 = vpop.permute.xlu0 %238
    %240 = vrot.lane.b32.xlu0 %v120, 88
    %v241 = vpop.permute.xlu0 %240
    %v243 = vsel %vm98, %v239, 0
    %v246 = vsel %vm98, %v241, 0
    %248 = vmatpush.bf16.xpose.msra.mxu0 0
    %249 = vmatpush.bf16.xpose.msra.mxu0 0
    %250 = vmatpush.bf16.xpose.msra.mxu0 0
    %251 = vmatpush.bf16.xpose.msra.mxu0 0
    %252 = vmatpush.bf16.xpose.msra.mxu0 0
    %253 = vmatpush.bf16.xpose.msra.mxu0 0
    %254 = vmatpush.bf16.xpose.msra.mxu0 0
    %255 = vmatpush.bf16.xpose.msra.mxu0 %v246
    %256 = vmatmul.bf16.gmra.mxu0 %v243
    %v257 = vpop.f32.mrf.mxu0
    %v258 = vadd.f32 0.0, %v257
    %v259 = vpop.f32.mrf.mxu0
    %260 = vdwg.mxu0
    %v261 = vsel %vm143, %v235, -inf
    %v262 = vsel %vm143, %v258, -inf
    %v263 = vsel %vm98, %v261, -inf
    %264 = vmax.xlane.f32.xlu0 %v263
    %v265 = vpop.xlane.xlu0 %264
    %v266 = vsel %vm98, %v262, -inf
    %267 = vmax.xlane.f32.xlu0 %v266
    %v268 = vpop.xlane.xlu0 %267
    %v269 = vsub.f32 %v261, %v265
    %v270 = vsub.f32 %v262, %v268
    %v271 = vmul.f32 %v269, 1.442695
    %v272 = vpow.pop %v271
    %v273 = vmul.f32 %v270, 1.442695
    %v274 = vpow.pop %v273
    %v275 = vsel %vm98, %v272, 0.0
    %276 = vadd.xlane.f32.xlu0 %v275
    %v277 = vpop.xlane.xlu0 %276
    %v278 = vsel %vm98, %v274, 0.0
    %279 = vadd.xlane.f32.xlu0 %v278
    %v280 = vpop.xlane.xlu0 %279
    %v281 = vrcp.pop %v277
    %v282 = vrcp.pop %v280
    %v283 = vmul.f32 %v272, %v281
    %v284 = vmul.f32 %v274, %v282
    %v285 = vpack.c.bf16 %v283, %v283
    %v286 = vpack.c.bf16 %v284, %v284
    %287 = vrot.lane.b32.xlu0 %v95, 56
    %v288 = vpop.permute.xlu0 %287
    %v290 = vsel %vm98, %v285, 0
    %v293 = vsel %vm175, %v288, 0
    %295 = vmatpush.bf16.msra.mxu0 0
    %296 = vmatpush.bf16.msra.mxu0 0
    %297 = vmatpush.bf16.msra.mxu0 0
    %298 = vmatpush.bf16.msra.mxu0 0
    %299 = vmatpush.bf16.msra.mxu0 0
    %300 = vmatpush.bf16.msra.mxu0 0
    %301 = vmatpush.bf16.msra.mxu0 0
    %302 = vmatpush.bf16.msra.mxu0 %v293
    %303 = vmatmul.bf16.gmra.mxu0 %v290
    %v304 = vpop.f32.mrf.mxu0
    %v305 = vadd.f32 0.0, %v304
    %v306 = vpop.f32.mrf.mxu0
    %307 = vdwg.mxu0
    %308 = vrot.lane.b32.xlu0 %v120, 56
    %v309 = vpop.permute.xlu0 %308
    %v311 = vsel %vm98, %v286, 0
    %v314 = vsel %vm175, %v309, 0
    %316 = vmatpush.bf16.msra.mxu0 0
    %317 = vmatpush.bf16.msra.mxu0 0
    %318 = vmatpush.bf16.msra.mxu0 0
    %319 = vmatpush.bf16.msra.mxu0 0
    %320 = vmatpush.bf16.msra.mxu0 0
    %321 = vmatpush.bf16.msra.mxu0 0
    %322 = vmatpush.bf16.msra.mxu0 0
    %323 = vmatpush.bf16.msra.mxu0 %v314
    %324 = vmatmul.bf16.gmra.mxu0 %v311
    %v325 = vpop.f32.mrf.mxu0
    %v326 = vadd.f32 0.0, %v325
    %v327 = vpop.f32.mrf.mxu0
    %328 = vdwg.mxu0
    %331 = vrot.lane.b32.xlu0 %v305, 8
    %v332 = vpop.permute.xlu0 %331
    %333 = vrot.lane.b32.xlu0 %v326, 8
    %v334 = vpop.permute.xlu0 %333
    %vm337 = vcmask 130112
    %338 = vst.msk [vmem:[#allocation7] sm:$0xff] %vm337, %v332
    %339 = vst.msk [vmem:[#allocation7 + $0x8] sm:$0xff] %vm337, %v334
    %340 = vrot.lane.b32.xlu0 %v95, 112
    %v341 = vpop.permute.xlu0 %340
    %342 = vrot.lane.b32.xlu0 %v95, 80
    %v343 = vpop.permute.xlu0 %342
    %v345 = vsel %vm98, %v341, 0
    %v348 = vsel %vm98, %v343, 0
    %350 = vmatpush.bf16.xpose.msra.mxu0 0
    %351 = vmatpush.bf16.xpose.msra.mxu0 0
    %352 = vmatpush.bf16.xpose.msra.mxu0 0
    %353 = vmatpush.bf16.xpose.msra.mxu0 0
    %354 = vmatpush.bf16.xpose.msra.mxu0 0
    %355 = vmatpush.bf16.xpose.msra.mxu0 0
    %356 = vmatpush.bf16.xpose.msra.mxu0 0
    %357 = vmatpush.bf16.xpose.msra.mxu0 %v348
    %358 = vmatmul.bf16.gmra.mxu0 %v345
    %v359 = vpop.f32.mrf.mxu0
    %v360 = vadd.f32 0.0, %v359
    %v361 = vpop.f32.mrf.mxu0
    %362 = vdwg.mxu0
    %363 = vrot.lane.b32.xlu0 %v120, 112
    %v364 = vpop.permute.xlu0 %363
    %365 = vrot.lane.b32.xlu0 %v120, 80
    %v366 = vpop.permute.xlu0 %365
    %v368 = vsel %vm98, %v364, 0
    %v371 = vsel %vm98, %v366, 0
    %373 = vmatpush.bf16.xpose.msra.mxu0 0
    %374 = vmatpush.bf16.xpose.msra.mxu0 0
    %375 = vmatpush.bf16.xpose.msra.mxu0 0
    %376 = vmatpush.bf16.xpose.msra.mxu0 0
    %377 = vmatpush.bf16.xpose.msra.mxu0 0
    %378 = vmatpush.bf16.xpose.msra.mxu0 0
    %379 = vmatpush.bf16.xpose.msra.mxu0 0
    %380 = vmatpush.bf16.xpose.msra.mxu0 %v371
    %381 = vmatmul.bf16.gmra.mxu0 %v368
    %v382 = vpop.f32.mrf.mxu0
    %v383 = vadd.f32 0.0, %v382
    %v384 = vpop.f32.mrf.mxu0
    %385 = vdwg.mxu0
    %v386 = vsel %vm143, %v360, -inf
    %v387 = vsel %vm143, %v383, -inf
    %v388 = vsel %vm98, %v386, -inf
    %389 = vmax.xlane.f32.xlu0 %v388
    %v390 = vpop.xlane.xlu0 %389
    %v391 = vsel %vm98, %v387, -inf
    %392 = vmax.xlane.f32.xlu0 %v391
    %v393 = vpop.xlane.xlu0 %392
    %v394 = vsub.f32 %v386, %v390
    %v395 = vsub.f32 %v387, %v393
    %v396 = vmul.f32 %v394, 1.442695
    %v397 = vpow.pop %v396
    %v398 = vmul.f32 %v395, 1.442695
    %v399 = vpow.pop %v398
    %v400 = vsel %vm98, %v397, 0.0
    %401 = vadd.xlane.f32.xlu0 %v400
    %v402 = vpop.xlane.xlu0 %401
    %v403 = vsel %vm98, %v399, 0.0
    %404 = vadd.xlane.f32.xlu0 %v403
    %v405 = vpop.xlane.xlu0 %404
    %v406 = vrcp.pop %v402
    %v407 = vrcp.pop %v405
    %v408 = vmul.f32 %v397, %v406
    %v409 = vmul.f32 %v399, %v407
    %v410 = vpack.c.bf16 %v408, %v408
    %v411 = vpack.c.bf16 %v409, %v409
    %412 = vrot.lane.b32.xlu0 %v95, 48
    %v413 = vpop.permute.xlu0 %412
    %v415 = vsel %vm98, %v410, 0
    %v418 = vsel %vm175, %v413, 0
    %420 = vmatpush.bf16.msra.mxu0 0
    %421 = vmatpush.bf16.msra.mxu0 0
    %422 = vmatpush.bf16.msra.mxu0 0
    %423 = vmatpush.bf16.msra.mxu0 0
    %424 = vmatpush.bf16.msra.mxu0 0
    %425 = vmatpush.bf16.msra.mxu0 0
    %426 = vmatpush.bf16.msra.mxu0 0
    %427 = vmatpush.bf16.msra.mxu0 %v418
    %428 = vmatmul.bf16.gmra.mxu0 %v415
    %v429 = vpop.f32.mrf.mxu0
    %v430 = vadd.f32 0.0, %v429
    %v431 = vpop.f32.mrf.mxu0
    %432 = vdwg.mxu0
    %433 = vrot.lane.b32.xlu0 %v120, 48
    %v434 = vpop.permute.xlu0 %433
    %v436 = vsel %vm98, %v411, 0
    %v439 = vsel %vm175, %v434, 0
    %441 = vmatpush.bf16.msra.mxu0 0
    %442 = vmatpush.bf16.msra.mxu0 0
    %443 = vmatpush.bf16.msra.mxu0 0
    %444 = vmatpush.bf16.msra.mxu0 0
    %445 = vmatpush.bf16.msra.mxu0 0
    %446 = vmatpush.bf16.msra.mxu0 0
    %447 = vmatpush.bf16.msra.mxu0 0
    %448 = vmatpush.bf16.msra.mxu0 %v439
    %449 = vmatmul.bf16.gmra.mxu0 %v436
    %v450 = vpop.f32.mrf.mxu0
    %v451 = vadd.f32 0.0, %v450
    %v452 = vpop.f32.mrf.mxu0
    %453 = vdwg.mxu0
    %456 = vrot.lane.b32.xlu0 %v430, 16
    %v457 = vpop.permute.xlu0 %456
    %458 = vrot.lane.b32.xlu0 %v451, 16
    %v459 = vpop.permute.xlu0 %458
    %vm462 = vcmask 195712
    %463 = vst.msk [vmem:[#allocation7] sm:$0xff] %vm462, %v457
    %464 = vst.msk [vmem:[#allocation7 + $0x8] sm:$0xff] %vm462, %v459
    %465 = vrot.lane.b32.xlu0 %v95, 104
    %v466 = vpop.permute.xlu0 %465
    %467 = vrot.lane.b32.xlu0 %v95, 72
    %v468 = vpop.permute.xlu0 %467
    %v470 = vsel %vm98, %v466, 0
    %v473 = vsel %vm98, %v468, 0
    %475 = vmatpush.bf16.xpose.msra.mxu0 0
    %476 = vmatpush.bf16.xpose.msra.mxu0 0
    %477 = vmatpush.bf16.xpose.msra.mxu0 0
    %478 = vmatpush.bf16.xpose.msra.mxu0 0
    %479 = vmatpush.bf16.xpose.msra.mxu0 0
    %480 = vmatpush.bf16.xpose.msra.mxu0 0
    %481 = vmatpush.bf16.xpose.msra.mxu0 0
    %482 = vmatpush.bf16.xpose.msra.mxu0 %v473
    %483 = vmatmul.bf16.gmra.mxu0 %v470
    %v484 = vpop.f32.mrf.mxu0
    %v485 = vadd.f32 0.0, %v484
    %v486 = vpop.f32.mrf.mxu0
    %487 = vdwg.mxu0
    %488 = vrot.lane.b32.xlu0 %v120, 104
    %v489 = vpop.permute.xlu0 %488
    %490 = vrot.lane.b32.xlu0 %v120, 72
    %v491 = vpop.permute.xlu0 %490
    %v493 = vsel %vm98, %v489, 0
    %v496 = vsel %vm98, %v491, 0
    %498 = vmatpush.bf16.xpose.msra.mxu0 0
    %499 = vmatpush.bf16.xpose.msra.mxu0 0
    %500 = vmatpush.bf16.xpose.msra.mxu0 0
    %501 = vmatpush.bf16.xpose.msra.mxu0 0
    %502 = vmatpush.bf16.xpose.msra.mxu0 0
    %503 = vmatpush.bf16.xpose.msra.mxu0 0
    %504 = vmatpush.bf16.xpose.msra.mxu0 0
    %505 = vmatpush.bf16.xpose.msra.mxu0 %v496
    %506 = vmatmul.bf16.gmra.mxu0 %v493
    %v507 = vpop.f32.mrf.mxu0
    %v508 = vadd.f32 0.0, %v507
    %v509 = vpop.f32.mrf.mxu0
    %510 = vdwg.mxu0
    %v511 = vsel %vm143, %v485, -inf
    %v512 = vsel %vm143, %v508, -inf
    %v513 = vsel %vm98, %v511, -inf
    %514 = vmax.xlane.f32.xlu0 %v513
    %v515 = vpop.xlane.xlu0 %514
    %v516 = vsel %vm98, %v512, -inf
    %517 = vmax.xlane.f32.xlu0 %v516
    %v518 = vpop.xlane.xlu0 %517
    %v519 = vsub.f32 %v511, %v515
    %v520 = vsub.f32 %v512, %v518
    %v521 = vmul.f32 %v519, 1.442695
    %v522 = vpow.pop %v521
    %v523 = vmul.f32 %v520, 1.442695
    %v524 = vpow.pop %v523
    %v525 = vsel %vm98, %v522, 0.0
    %526 = vadd.xlane.f32.xlu0 %v525
    %v527 = vpop.xlane.xlu0 %526
    %v528 = vsel %vm98, %v524, 0.0
    %529 = vadd.xlane.f32.xlu0 %v528
    %v530 = vpop.xlane.xlu0 %529
    %v531 = vrcp.pop %v527
    %v532 = vrcp.pop %v530
    %v533 = vmul.f32 %v522, %v531
    %v534 = vmul.f32 %v524, %v532
    %v535 = vpack.c.bf16 %v533, %v533
    %v536 = vpack.c.bf16 %v534, %v534
    %537 = vrot.lane.b32.xlu0 %v95, 40
    %v538 = vpop.permute.xlu0 %537
    %v540 = vsel %vm98, %v535, 0
    %v543 = vsel %vm175, %v538, 0
    %545 = vmatpush.bf16.msra.mxu0 0
    %546 = vmatpush.bf16.msra.mxu0 0
    %547 = vmatpush.bf16.msra.mxu0 0
    %548 = vmatpush.bf16.msra.mxu0 0
    %549 = vmatpush.bf16.msra.mxu0 0
    %550 = vmatpush.bf16.msra.mxu0 0
    %551 = vmatpush.bf16.msra.mxu0 0
    %552 = vmatpush.bf16.msra.mxu0 %v543
    %553 = vmatmul.bf16.gmra.mxu0 %v540
    %v554 = vpop.f32.mrf.mxu0
    %v555 = vadd.f32 0.0, %v554
    %v556 = vpop.f32.mrf.mxu0
    %557 = vdwg.mxu0
    %558 = vrot.lane.b32.xlu0 %v120, 40
    %v559 = vpop.permute.xlu0 %558
    %v561 = vsel %vm98, %v536, 0
    %v564 = vsel %vm175, %v559, 0
    %566 = vmatpush.bf16.msra.mxu0 0
    %567 = vmatpush.bf16.msra.mxu0 0
    %568 = vmatpush.bf16.msra.mxu0 0
    %569 = vmatpush.bf16.msra.mxu0 0
    %570 = vmatpush.bf16.msra.mxu0 0
    %571 = vmatpush.bf16.msra.mxu0 0
    %572 = vmatpush.bf16.msra.mxu0 0
    %573 = vmatpush.bf16.msra.mxu0 %v564
    %574 = vmatmul.bf16.gmra.mxu0 %v561
    %v575 = vpop.f32.mrf.mxu0
    %v576 = vadd.f32 0.0, %v575
    %v577 = vpop.f32.mrf.mxu0
    %578 = vdwg.mxu0
    %581 = vrot.lane.b32.xlu0 %v555, 24
    %v582 = vpop.permute.xlu0 %581
    %583 = vrot.lane.b32.xlu0 %v576, 24
    %v584 = vpop.permute.xlu0 %583
    %vm587 = vcmask 261312
    %588 = vst.msk [vmem:[#allocation7] sm:$0xff] %vm587, %v582
    %589 = vst.msk [vmem:[#allocation7 + $0x8] sm:$0xff] %vm587, %v584
    // Predicated region
    $region18: #{tpu_custom_call.1} parent=1 // pred_check
      _
    $region19: #{tpu_custom_call.1} parent=1 // pred_check_branch
      %591 = sbr.rel (0) target = $region21
    $region20: #{tpu_custom_call.1} parent=1 // pred_region
      %593 = vsyncadd [#allocation4], 0
      %s594 = sshll.u32 [#allocation7], 4
      %s595 = int_to_ptr.vmem [resolvable:$true] %s594
      %s596 = sshll.u32 %s2, 4
      %s597 = int_to_ptr.hbm [resolvable:$true] %s596
      %602 = dma.vmem_to_hbm [thread:$0]  %s595, 256, %s597, [#allocation4], 128, 128, 8
    $region21: #{tpu_custom_call.1} parent=1 // pred_fallthru
      _
    // Predicated region
    $region22: #{tpu_custom_call.1} parent=1 // pred_check
      _
    $region23: #{tpu_custom_call.1} parent=1 // pred_check_branch
      %604 = sbr.rel (0) target = $region25
    $region24: #{tpu_custom_call.1} parent=1 // pred_region
      %606 = dma.done [#allocation4], 256
    $region25: #{tpu_custom_call.1} parent=1 // pred_fallthru
      _
    %607 = vsyncpa [#allocation3], 1
    %608 = vsyncpa [#allocation6], 1
    %609 = vsyncpa [#allocation4], 1

</llo_original>
